<compile_context>
chip_gen: v7x
topology: tpu7x:2x2x1
jax: 0.10.0
libtpu: 0.0.40
codegen_flags: <defaults>
</compile_context>

<pallas_src>
import math

import jax
import jax.numpy as jnp
from jax.experimental import pallas as pl
from jax.experimental.pallas import tpu as pltpu


def _idft_conv_kernel(x_ref, w_ref, mt_ref, o_ref, conv_sc):
    """One batch block: Conv2d (per-sample matmuls) + 2-D real inverse DFT.

    x_ref  : (B_blk, CKKp_pad, HW) bf16  im2col columns per sample (+ ones row, zero-padded K)
    w_ref  : (C_out, CKKp_pad)     bf16  conv weight (+ bias column, zero-padded K)
    mt_ref : (HW, HW)              bf16  transposed, 1/(H*W)-scaled real-iDFT Kronecker matrix
    o_ref  : (B_blk, C_out, HW)          NCHW-ordered output block
    conv_sc: (B_blk*C_out, HW)     bf16  VMEM scratch with the conv result, HW lane-dense
    """
    B_blk, C_out, HW = o_ref.shape
    w = w_ref[...]
    # Conv2d + bias: one small (C_out, CKKp) @ (CKKp, HW) matmul per sample, written
    # directly into that sample's scratch rows -> no lane<->sublane relayout.
    for b in range(B_blk):
        conv_b = jnp.dot(w, x_ref[b], preferred_element_type=jnp.float32)   # (C_out, HW)
        conv_sc[pl.ds(b * C_out, C_out), :] = conv_b.astype(conv_sc.dtype)
    # 2-D real inverse DFT of every (sample, channel) spatial vector as ONE matmul
    # with a filled MXU M-dim (B_blk*C_out rows).
    out = jnp.dot(conv_sc[...], mt_ref[...], preferred_element_type=jnp.float32)
    # (B_blk*C_out, HW) -> (B_blk, C_out, HW) is a free leading-dim split when
    # C_out is a sublane multiple; the store is already NCHW-ordered.
    o_ref[...] = out.reshape(B_blk, C_out, HW).astype(o_ref.dtype)


def idft2d_conv_block(x, weight, bias, cos_h, sin_h, cos_w, sin_w, *,
                      padding=1, block_batch=None):
    """Conv2d(stride=1, groups=1, padding) followed by the real 2-D inverse DFT (NCHW)."""
    N, C_in, H_in, W_in = x.shape
    C_out, C_in_w, K, K2 = weight.shape
    assert C_in_w == C_in and K == K2
    H = H_in + 2 * padding - K + 1
    W = W_in + 2 * padding - K + 1
    HW = H * W
    assert cos_h.shape == (H, H) and cos_w.shape == (W, W), \
        "iDft2d width/height must match the conv output spatial size"
    assert HW % 128 == 0, "H*W must be a multiple of 128 for a lane-dense layout"

    CKK = C_in * K * K
    CKKp = CKK + 1                       # +1: ones row folds the bias into the matmul
    CKKp_pad = -(-CKKp // 8) * 8         # sublane-aligned contraction dim

    # ---- block-batch: fill the dominant matmul's MXU M-dim (C_out*B_blk >= 256),
    # but keep >= 2 grid steps when possible so both v7x TensorCores get work. ----
    if block_batch is None:
        block_batch = max(1, -(-256 // C_out))
    B_blk = max(1, min(block_batch, N))
    if N >= 2 and pl.cdiv(N, B_blk) < 2:
        B_blk = -(-N // 2)
    N_pad = pl.cdiv(N, B_blk) * B_blk
    n_steps = N_pad // B_blk

    # ---------------- host-side glue (cheap, layout-only XLA ops) ----------------
    # Cast to bf16 BEFORE the K*K unfold so the 9x im2col blow-up is half the bytes.
    # TODO(synk): move the unfold into the kernel (K*K shifted-slab matmuls over the
    # padded input loaded once per batch block) to remove the K^2 HBM blow-up entirely.
    x_bf = x.astype(jnp.bfloat16)
    x_pad = jnp.pad(x_bf, ((0, 0), (0, 0), (padding, padding), (padding, padding)))
    patches = [x_pad[:, :, kh:kh + H, kw:kw + W]
               for kh in range(K) for kw in range(K)]            # K*K x (N, C_in, H, W)
    x_col = jnp.stack(patches, axis=2).reshape(N, CKK, HW)       # rows = (c_in, kh, kw)
    x_col = jnp.concatenate(                                     # ones row -> bias fold
        [x_col, jnp.ones((N, 1, HW), jnp.bfloat16)], axis=1)     # (N, CKKp, HW)
    x_col = jnp.pad(x_col, ((0, N_pad - N), (0, CKKp_pad - CKKp), (0, 0)))

    # Conv weight flattened tap-minor (+ bias column), zero-padded to CKKp_pad.
    w2 = jnp.concatenate(
        [weight.reshape(C_out, CKK), bias.reshape(C_out, 1)], axis=1)
    w2 = jnp.pad(w2, ((0, 0), (0, CKKp_pad - CKKp))).astype(jnp.bfloat16)

    # 1/(H*W)-scaled real-iDFT Kronecker matrix, transposed for rhs use.
    # (Cheap relative to the kernel; cache it outside when calling repeatedly.)
    m = (jnp.kron(cos_h, cos_w) - jnp.kron(sin_h, sin_w)) / float(HW)
    mt = m.T.astype(jnp.bfloat16)                                # (HW, HW)

    # ------------- VMEM budget (double buffering counted explicitly) -------------
    x_tile = B_blk * CKKp_pad * HW * 2
    w_tile = C_out * CKKp_pad * 2
    mt_tile = HW * HW * 2
    o_tile = B_blk * C_out * HW * x.dtype.itemsize
    conv_scr = B_blk * C_out * HW * 2
    live_f32 = B_blk * C_out * HW * 4
    vmem_bytes = 2 * (x_tile + w_tile + mt_tile + o_tile) + conv_scr + live_f32
    assert vmem_bytes <= 48 * 1024 * 1024, (
        f"HW/B_blk too large for VMEM ({vmem_bytes / 2**20:.1f} MiB needed; "
        "v7x has 64 MiB physical)")
    vmem_limit = int(min(48 * 1024 * 1024, max(vmem_bytes + (4 << 20), 16 << 20)))

    flops = 2 * N_pad * C_out * HW * (CKKp_pad + HW)
    bytes_accessed = (x_col.size * 2 + w2.size * 2 + mt.size * 2
                      + N_pad * C_out * HW * x.dtype.itemsize)

    out = pl.pallas_call(
        _idft_conv_kernel,
        out_shape=jax.ShapeDtypeStruct((N_pad, C_out, HW), x.dtype),
        grid=(n_steps,),
        in_specs=[
            pl.BlockSpec((B_blk, CKKp_pad, HW), lambda b: (b, 0, 0)),   # im2col slab
            pl.BlockSpec((C_out, CKKp_pad), lambda b: (0, 0)),          # grid-invariant
            pl.BlockSpec((HW, HW), lambda b: (0, 0)),                   # grid-invariant
        ],
        out_specs=pl.BlockSpec((B_blk, C_out, HW), lambda b: (b, 0, 0)),
        scratch_shapes=[pltpu.VMEM((B_blk * C_out, HW), jnp.bfloat16)],
        compiler_params=pltpu.CompilerParams(
            dimension_semantics=("parallel",),
            vmem_limit_bytes=vmem_limit),
        cost_estimate=pl.CostEstimate(
            flops=flops, transcendentals=0, bytes_accessed=bytes_accessed),
    )(x_col, w2, mt)

    # Already NCHW-ordered: drop batch padding, then a pure-view reshape.
    return out[:N].reshape(N, C_out, H, W)


def make_idft_matrices(n):
    k = jnp.arange(n, dtype=jnp.float32)
    ang = 2.0 * math.pi * jnp.outer(k, k) / n
    return jnp.cos(ang), jnp.sin(ang)


def reference(x, weight, bias, cos_h, sin_h, cos_w, sin_w, padding=1):
    conv = jax.lax.conv_general_dilated(
        x, weight, window_strides=(1, 1),
        padding=((padding, padding), (padding, padding)),
        dimension_numbers=("NCHW", "OIHW", "NCHW"))
    conv = conv + bias[None, :, None, None]
    H, W = conv.shape[2], conv.shape[3]
    return (jnp.einsum("kn,bcnm,lm->bckl", cos_h, conv, cos_w)
            - jnp.einsum("kn,bcnm,lm->bckl", sin_h, conv, sin_w)) / (H * W)


if __name__ == "__main__":
    # Small shapes consistent with the module: width = height = conv output size.
    N, C_in, C_out = 2, 4, 8
    H_in = W_in = 16
    K, padding = 3, 1
    H = W = H_in + 2 * padding - K + 1  # 16

    key = jax.random.PRNGKey(0)
    kx, kw, kb = jax.random.split(key, 3)
    x = jax.random.normal(kx, (N, C_in, H_in, W_in), jnp.float32)

    # Deterministic Conv2d init (PyTorch-style uniform bounds).
    fan_in = C_in * K * K
    bound = 1.0 / math.sqrt(fan_in)
    weight = jax.random.uniform(kw, (C_out, C_in, K, K), jnp.float32, -bound, bound)
    bias = jax.random.uniform(kb, (C_out,), jnp.float32, -bound, bound)

    # Inverse-DFT bases (the `fixed` flag only controls trainability).
    cos_h, sin_h = make_idft_matrices(H)
    cos_w, sin_w = make_idft_matrices(W)

    out = idft2d_conv_block(x, weight, bias, cos_h, sin_h, cos_w, sin_w,
                            padding=padding)
    out = jax.block_until_ready(out)

    ref = jax.block_until_ready(
        reference(x, weight, bias, cos_h, sin_h, cos_w, sin_w, padding=padding))

    assert out.shape == (N, C_out, H, W)
    max_err = float(jnp.max(jnp.abs(out - ref)))
    assert jnp.all(jnp.isfinite(out)), "non-finite output"
    assert max_err < 5e-2, f"mismatch vs reference: {max_err}"
    print("KERNEL_OK")
</pallas_src>

<mosaic_0001>
module attributes {stable_mosaic.version = 11 : i64} {
  func.func @_idft_conv_kernel(%arg0: i32, %arg1: memref<1x40x256xbf16, #tpu.memory_space<vmem>>, %arg2: memref<8x40xbf16, #tpu.memory_space<vmem>>, %arg3: memref<256x256xbf16, #tpu.memory_space<vmem>>, %arg4: memref<1x8x256xf32, #tpu.memory_space<vmem>>, %arg5: memref<8x256xbf16, #tpu.memory_space<vmem>>) attributes {dimension_semantics = [#tpu.dimension_semantics<parallel>], iteration_bounds = array<i64: 2>, scalar_prefetch = 0 : i64, scratch_operands = 1 : i64, tpu.core_type = #tpu.core_type<tc>, window_params = [{transform_indices = @transform_0, window_bounds = array<i64: 1, 40, 256>}, {pipeline_mode = #tpu.pipeline_mode<synchronous>, transform_indices = @transform_1, window_bounds = array<i64: 8, 40>}, {pipeline_mode = #tpu.pipeline_mode<synchronous>, transform_indices = @transform_2, window_bounds = array<i64: 256, 256>}, {transform_indices = @transform_3, window_bounds = array<i64: 1, 8, 256>}]} {
    %c0 = arith.constant 0 : index
    %c0_0 = arith.constant 0 : index
    %0 = vector.load %arg2[%c0, %c0_0] : memref<8x40xbf16, #tpu.memory_space<vmem>>, vector<8x40xbf16>
    %c0_1 = arith.constant 0 : index
    %c0_2 = arith.constant 0 : index
    %c0_3 = arith.constant 0 : index
    %1 = vector.load %arg1[%c0_1, %c0_2, %c0_3] : memref<1x40x256xbf16, #tpu.memory_space<vmem>>, vector<1x40x256xbf16>
    %2 = vector.shape_cast %1 : vector<1x40x256xbf16> to vector<40x256xbf16>
    %cst = arith.constant dense<0.000000e+00> : vector<8x256xf32>
    %3 = tpu.matmul %0, %2, %cst {dimension_numbers = #tpu.dot_dimension_numbers<[1], [0], [0], [1], [0, 0, 1, 1], [], []>} : vector<8x40xbf16>, vector<40x256xbf16>, vector<8x256xf32> -> vector<8x256xf32>
    %4 = arith.truncf %3 : vector<8x256xf32> to vector<8x256xbf16>
    %c0_4 = arith.constant 0 : index
    %c0_5 = arith.constant 0 : index
    %5 = vector.load %arg5[%c0_4, %c0_5] : memref<8x256xbf16, #tpu.memory_space<vmem>>, vector<8x256xbf16>
    tpu.vector_store %arg5[%c0_4, %c0_5], %4 {strides = array<i32>} : memref<8x256xbf16, #tpu.memory_space<vmem>>, vector<8x256xbf16>,
    %c0_6 = arith.constant 0 : index
    %c0_7 = arith.constant 0 : index
    %6 = vector.load %arg5[%c0_6, %c0_7] : memref<8x256xbf16, #tpu.memory_space<vmem>>, vector<8x256xbf16>
    %c0_8 = arith.constant 0 : index
    %c0_9 = arith.constant 0 : index
    %7 = vector.load %arg3[%c0_8, %c0_9] : memref<256x256xbf16, #tpu.memory_space<vmem>>, vector<256x256xbf16>
    %cst_10 = arith.constant dense<0.000000e+00> : vector<8x256xf32>
    %8 = tpu.matmul %6, %7, %cst_10 {dimension_numbers = #tpu.dot_dimension_numbers<[1], [0], [0], [1], [0, 0, 1, 1], [], []>} : vector<8x256xbf16>, vector<256x256xbf16>, vector<8x256xf32> -> vector<8x256xf32>
    %9 = vector.shape_cast %8 : vector<8x256xf32> to vector<1x8x256xf32>
    %c0_11 = arith.constant 0 : index
    %c0_12 = arith.constant 0 : index
    %c0_13 = arith.constant 0 : index
    %10 = vector.load %arg4[%c0_11, %c0_12, %c0_13] : memref<1x8x256xf32, #tpu.memory_space<vmem>>, vector<1x8x256xf32>
    tpu.vector_store %arg4[%c0_11, %c0_12, %c0_13], %9 {strides = array<i32>} : memref<1x8x256xf32, #tpu.memory_space<vmem>>, vector<1x8x256xf32>,
    return
  }
  func.func @transform_0(%arg0: i32) -> (i32, i32, i32) {
    %c0_i32 = arith.constant 0 : i32
    %c0_i32_0 = arith.constant 0 : i32
    %c0_i32_1 = arith.constant 0 : i32
    return %arg0, %c0_i32, %c0_i32_0 : i32, i32, i32
  }
  func.func @transform_1(%arg0: i32) -> (i32, i32) {
    %c0_i32 = arith.constant 0 : i32
    %c0_i32_0 = arith.constant 0 : i32
    %c0_i32_1 = arith.constant 0 : i32
    return %c0_i32, %c0_i32_0 : i32, i32
  }
  func.func @transform_2(%arg0: i32) -> (i32, i32) {
    %c0_i32 = arith.constant 0 : i32
    %c0_i32_0 = arith.constant 0 : i32
    %c0_i32_1 = arith.constant 0 : i32
    return %c0_i32, %c0_i32_0 : i32, i32
  }
  func.func @transform_3(%arg0: i32) -> (i32, i32, i32) {
    %c0_i32 = arith.constant 0 : i32
    %c0_i32_0 = arith.constant 0 : i32
    %c0_i32_1 = arith.constant 0 : i32
    return %arg0, %c0_i32, %c0_i32_0 : i32, i32, i32
  }
}

</mosaic_0001>

<llo_original>
// kernel: tpu_custom_call.1
$region0: #{tpu_custom_call.1}
  #allocation0 [shape = 'u32[]', space=smem, size = 0x4, offset = 0x4, fixed_abs, tag = 'smem constant byte address 0x4 - core index']
  #allocation1 [shape = 'u32[144,128]{1,0:T(1,128)}', space=vmem, size = 0x12000, scoped, tag = 'internal scratch']
  #allocation2 [shape = 'bf16[8,256]{1,0:T(8,128)(2,1)}', space=vmem, size = 0x1000, scoped, tag = 'scratch operand']
  %s0 = inlined_call_operand.hbm [shape: bf16[2,40,256], index: 0, kind: input, shape index: {}]
  %s1 = inlined_call_operand.hbm [shape: bf16[8,40], index: 1, kind: input, shape index: {}]
  %s2 = inlined_call_operand.hbm [shape: bf16[256,256], index: 2, kind: input, shape index: {}]
  %s3 = inlined_call_operand.hbm [shape: f32[2,8,256], index: 3, kind: output, shape index: {}]
  %s4 = sld [smem:[#allocation0]]
  $region57: #{tpu_custom_call.1} parent=0
    _
  %s6 = ssub.s32 1, %s4
  %s7 = scalar_select 0, %s6, %s4
  $region1: #{tpu_custom_call.1} parent=0
    #allocation3 [shape = 'u8[40960]{0}', space=vmem, size = 0xa000, scoped, tag = 'input window, operand 0']
    #allocation4 [shape = 's32[2]{0}', space=sflag, size = 0x8, scoped, tag = 'scoped memory for tpu_custom_call.1']
    #allocation5 [shape = 's32[2]{0}', space=sflag, size = 0x8, scoped, tag = 'scoped memory for tpu_custom_call.1']
    #allocation6 [shape = 'u8[2048]{0}', space=vmem, size = 0x800, scoped, tag = 'input window, operand 1, single buffered']
    #allocation7 [shape = 's32[1]{0}', space=sflag, size = 0x4, scoped, tag = 'scoped memory for tpu_custom_call.1']
    #allocation8 [shape = 'u8[131072]{0}', space=vmem, size = 0x20000, scoped, tag = 'input window, operand 2, single buffered']
    #allocation9 [shape = 'u8[16384]{0}', space=vmem, size = 0x4000, scoped, tag = 'output window, operand 0']
    %8 = vsyncpa [#allocation4], 0
    %s9 = scalar_lea.sflag [#allocation4], 1
    %10 = vsyncpa %s9, 0
    %11 = vsyncpa [#allocation7], 0
    %12 = vsyncpa [#allocation5], 0
    %s13 = scalar_lea.sflag [#allocation5], 1
    %14 = vsyncpa %s13, 0
    loop: start=0, step=1, limit=4
    $region2: #{tpu_custom_call.1} parent=1 // loop_pre_header
      _
    $region3: #{tpu_custom_call.1} parent=1 // loop_header
      %s16 = sphi 0, %s20
      %p17 = scmp.ge.s32.totalorder %s16, 4
      %s26 = sphi 0, %s28
      %s29 = sphi 0, %s26
      %s30 = sphi 0, %s29
      %s46 = sphi 0, %s30
      %s50 = sphi 0, %s50
      %s52 = sphi 0, %s50
      %s53 = sphi 0, %s52
      %s67 = sphi 0, %s53
      %s71 = sphi 0, %s71
      %s73 = sphi 0, %s71
      %s74 = sphi 0, %s73
      %s88 = sphi 0, %s74
      %s94 = sphi 0, %s96
      %s97 = sphi 0, %s94
      %s98 = sphi 0, %s97
      %s114 = sphi 0, %s98
    $region4: #{tpu_custom_call.1} parent=1 // loop_header_branch
      %19 = sbr.rel (%p17) target = $region8
    $region5: #{tpu_custom_call.1} parent=1 // loop_body
      %s21 = ssub.s32 %s16, 1
      %s22 = ssub.s32 %s16, 2
      %s23 = sadd.s32 %s16, 1
      %s24 = ssub.s32 %s16, %s23
      %p25 = scmp.eq.s32.totalorder %s24, 0
      %s27 = sadd.s32 %s26, 1
      %s28 = scalar_select %p25, %s26, %s27
      %p31 = pneg %p25
      %p32 = scmp.eq.s32.totalorder %s16, 1
      %p33 = por %p31, %p32
      %p34 = scmp.ne.s32.totalorder %s26, %s29
      %p35 = scmp.eq.s32.totalorder %s16, 0
      %p36 = por %p34, %p35
      %p37 = scmp.ne.s32.totalorder %s26, %s29
      %p38 = scmp.eq.s32.totalorder %s21, 1
      %p39 = por %p37, %p38
      %p40 = scmp.ne.s32.totalorder %s29, %s30
      %p41 = scmp.eq.s32.totalorder %s21, 0
      %p42 = por %p40, %p41
      %p43 = scmp.ne.s32.totalorder %s29, %s30
      %p44 = scmp.eq.s32.totalorder %s22, 1
      %p45 = por %p43, %p44
      %p47 = scmp.ne.s32.totalorder %s30, %s46
      %p48 = scmp.eq.s32.totalorder %s22, 0
      %p49 = por %p47, %p48
      %s51 = sadd.s32 %s50, 1
      %p54 = scmp.eq.s32.totalorder %s16, 1
      %p55 = scmp.ne.s32.totalorder %s50, %s52
      %p56 = scmp.eq.s32.totalorder %s16, 0
      %p57 = por %p55, %p56
      %p58 = scmp.ne.s32.totalorder %s50, %s52
      %p59 = scmp.eq.s32.totalorder %s21, 1
      %p60 = por %p58, %p59
      %p61 = scmp.ne.s32.totalorder %s52, %s53
      %p62 = scmp.eq.s32.totalorder %s21, 0
      %p63 = por %p61, %p62
      %p64 = scmp.ne.s32.totalorder %s52, %s53
      %p65 = scmp.eq.s32.totalorder %s22, 1
      %p66 = por %p64, %p65
      %p68 = scmp.ne.s32.totalorder %s53, %s67
      %p69 = scmp.eq.s32.totalorder %s22, 0
      %p70 = por %p68, %p69
      %s72 = sadd.s32 %s71, 1
      %p75 = scmp.eq.s32.totalorder %s16, 1
      %p76 = scmp.ne.s32.totalorder %s71, %s73
      %p77 = scmp.eq.s32.totalorder %s16, 0
      %p78 = por %p76, %p77
      %p79 = scmp.ne.s32.totalorder %s71, %s73
      %p80 = scmp.eq.s32.totalorder %s21, 1
      %p81 = por %p79, %p80
      %p82 = scmp.ne.s32.totalorder %s73, %s74
      %p83 = scmp.eq.s32.totalorder %s21, 0
      %p84 = por %p82, %p83
      %p85 = scmp.ne.s32.totalorder %s73, %s74
      %p86 = scmp.eq.s32.totalorder %s22, 1
      %p87 = por %p85, %p86
      %p89 = scmp.ne.s32.totalorder %s74, %s88
      %p90 = scmp.eq.s32.totalorder %s22, 0
      %p91 = por %p89, %p90
      %s92 = ssub.s32 %s16, %s23
      %p93 = scmp.eq.s32.totalorder %s92, 0
      %s95 = sadd.s32 %s94, 1
      %s96 = scalar_select %p93, %s94, %s95
      %p99 = pneg %p93
      %p100 = scmp.eq.s32.totalorder %s16, 1
      %p101 = por %p99, %p100
      %p102 = scmp.ne.s32.totalorder %s94, %s97
      %p103 = scmp.eq.s32.totalorder %s16, 0
      %p104 = por %p102, %p103
      %p105 = scmp.ne.s32.totalorder %s94, %s97
      %p106 = scmp.eq.s32.totalorder %s21, 1
      %p107 = por %p105, %p106
      %p108 = scmp.ne.s32.totalorder %s97, %s98
      %p109 = scmp.eq.s32.totalorder %s21, 0
      %p110 = por %p108, %p109
      %p111 = scmp.ne.s32.totalorder %s97, %s98
      %p112 = scmp.eq.s32.totalorder %s22, 1
      %p113 = por %p111, %p112
      %p115 = scmp.ne.s32.totalorder %s98, %s114
      %p116 = scmp.eq.s32.totalorder %s22, 0
      %p117 = por %p115, %p116
      %p118 = scmp.le.s32.totalorder 1, %s16
      %p119 = scmp.lt.s32.totalorder %s16, 3
      %p120 = pnand %p118, %p119
      %p121 = pneg %p120
      // Predicated region
      $region9: #{tpu_custom_call.1} parent=5 // pred_check
        _
      $region10: #{tpu_custom_call.1} parent=5 // pred_check_branch
        %123 = sbr.rel (%p120) target = $region12
      $region11: #{tpu_custom_call.1} parent=5 // pred_region
        %s124 = ssub.s32 %s16, 1
        // Predicated region
        $region13: #{tpu_custom_call.1} parent=11 // pred_check
          %p125 = pneg %p63
        $region14: #{tpu_custom_call.1} parent=11 // pred_check_branch
          %127 = sbr.rel (%p125) target = $region16
        $region15: #{tpu_custom_call.1} parent=11 // pred_region
          %s129 = ssub.s32 64, 64
          %130 = vsyncadd [#allocation7], %s129
          %s132 = sshll.u32 [#allocation6], 4
          %s133 = int_to_ptr.vmem [resolvable:$true] %s132
          %135 = dma.hbm_to_vmem [thread:$0]  %s1, 64, %s133, [#allocation7]
        $region16: #{tpu_custom_call.1} parent=11 // pred_fallthru
          _
        // Predicated region
        $region17: #{tpu_custom_call.1} parent=11 // pred_check
          %p136 = pneg %p84
        $region18: #{tpu_custom_call.1} parent=11 // pred_check_branch
          %138 = sbr.rel (%p136) target = $region20
        $region19: #{tpu_custom_call.1} parent=11 // pred_region
          %s140 = ssub.s32 4096, 4096
          %141 = vsyncadd [#allocation7], %s140
          %s142 = sshll.u32 [#allocation8], 4
          %s143 = int_to_ptr.vmem [resolvable:$true] %s142
          %148 = dma.hbm_to_vmem [thread:$0]  %s2, 4096, %s143, [#allocation7], 128, 128, 8
        $region20: #{tpu_custom_call.1} parent=11 // pred_fallthru
          _
      $region12: #{tpu_custom_call.1} parent=5 // pred_fallthru
        _
      %p149 = scmp.lt.s32.totalorder %s16, 2
      // Predicated region
      $region21: #{tpu_custom_call.1} parent=5 // pred_check
        %p150 = pneg %p149
      $region22: #{tpu_custom_call.1} parent=5 // pred_check_branch
        %152 = sbr.rel (%p150) target = $region24
      $region23: #{tpu_custom_call.1} parent=5 // pred_region
        // Predicated region
        $region25: #{tpu_custom_call.1} parent=23 // pred_check
          %p153 = pneg %p36
        $region26: #{tpu_custom_call.1} parent=23 // pred_check_branch
          %155 = sbr.rel (%p153) target = $region28
        $region27: #{tpu_custom_call.1} parent=23 // pred_region
          %s156 = sand.u32 %s26, 1
          %s157 = scalar_lea.sflag [#allocation4], %s156
          %s158 = sand.u32 %s26, 1
          %s159 = smul.addr %s158, 40
          %s160 = scalar_lea.vmem [#allocation3], %s159
          %s162 = ssub.s32 640, 640
          %163 = vsyncadd %s157, %s162
          %s164 = smul.addr %s16, 10
          %s165 = smul.addr %s164, 64
          %s166 = scalar_lea.hbm %s0, %s165
          %s167 = sshll.u32 %s160, 4
          %s168 = int_to_ptr.vmem [resolvable:$true] %s167
          %173 = dma.hbm_to_vmem [thread:$0]  %s166, 640, %s168, %s157, 128, 128, 8
        $region28: #{tpu_custom_call.1} parent=23 // pred_fallthru
          _
      $region24: #{tpu_custom_call.1} parent=5 // pred_fallthru
        _
      %p174 = scmp.le.s32.totalorder 1, %s16
      %p175 = scmp.lt.s32.totalorder %s16, 3
      %p176 = pnand %p174, %p175
      %p177 = pneg %p176
      // Predicated region
      $region29: #{tpu_custom_call.1} parent=5 // pred_check
        _
      $region30: #{tpu_custom_call.1} parent=5 // pred_check_branch
        %179 = sbr.rel (%p176) target = $region32
      $region31: #{tpu_custom_call.1} parent=5 // pred_region
        %s180 = ssub.s32 %s16, 1
        %s181 = sand.u32 %s29, 1
        %s182 = scalar_lea.sflag [#allocation4], %s181
        %s183 = sand.u32 %s29, 1
        %s184 = smul.addr %s183, 40
        %s185 = scalar_lea.vmem [#allocation3], %s184
        // Predicated region
        $region33: #{tpu_custom_call.1} parent=31 // pred_check
          %p186 = pneg %p42
        $region34: #{tpu_custom_call.1} parent=31 // pred_check_branch
          %188 = sbr.rel (%p186) target = $region36
        $region35: #{tpu_custom_call.1} parent=31 // pred_region
          %189 = dma.done %s182, 640
        $region36: #{tpu_custom_call.1} parent=31 // pred_fallthru
          _
        // Predicated region
        $region37: #{tpu_custom_call.1} parent=31 // pred_check
          %p190 = pneg %p63
        $region38: #{tpu_custom_call.1} parent=31 // pred_check_branch
          %192 = sbr.rel (%p190) target = $region40
        $region39: #{tpu_custom_call.1} parent=31 // pred_region
          %193 = dma.done [#allocation7], 64
        $region40: #{tpu_custom_call.1} parent=31 // pred_fallthru
          _
        // Predicated region
        $region41: #{tpu_custom_call.1} parent=31 // pred_check
          %p194 = pneg %p84
        $region42: #{tpu_custom_call.1} parent=31 // pred_check_branch
          %196 = sbr.rel (%p194) target = $region44
        $region43: #{tpu_custom_call.1} parent=31 // pred_region
          %197 = dma.done [#allocation7], 4096
        $region44: #{tpu_custom_call.1} parent=31 // pred_fallthru
          _
        %s198 = sand.u32 %s29, 1
        %s199 = scalar_lea.sflag [#allocation4], %s198
        %s200 = sand.u32 %s29, 1
        %s201 = smul.addr %s200, 40
        %s202 = scalar_lea.vmem [#allocation3], %s201
        %p203 = pneg %p42
        %p204 = pneg %p39
        %p205 = pneg %p63
        %p206 = pneg %p60
        %p207 = pneg %p84
        %p208 = pneg %p81
        %p209 = pneg %p110
        %p210 = pneg %p107
        %s211 = sand.u32 %s97, 1
        %s212 = scalar_lea.sflag [#allocation5], %s211
        %s213 = sand.u32 %s97, 1
        %s214 = smul.addr %s213, 16
        %s215 = scalar_lea.vmem [#allocation9], %s214
        %v217 = vld [vmem:[#allocation6] sm:$0xf]
        %v218 = vld [vmem:[%s185] sm:$0xff]
        %v219 = vld [vmem:[%s185 + $0x8] sm:$0xff]
        %v220 = vld [vmem:[%s185 + $0x10] sm:$0xff]
        %v221 = vld [vmem:[%s185 + $0x18] sm:$0xff]
        %v222 = vld [vmem:[%s185 + $0x20] sm:$0xff]
        %v228 = vunpack.c.l.b16 %v218
        %v229 = vunpack.c.h.b16 %v218
        %v230 = vunpack.c.l.b16 %v219
        %v231 = vunpack.c.h.b16 %v219
        %v232 = vunpack.c.l.b16 %v220
        %v233 = vunpack.c.h.b16 %v220
        %v234 = vunpack.c.l.b16 %v221
        %v235 = vunpack.c.h.b16 %v221
        %v236 = vunpack.c.l.b16 %v222
        %v237 = vunpack.c.h.b16 %v222
        %v238 = vpack.c.b16 %v230, %v228
        %v239 = vpack.c.b16 %v231, %v229
        %v240 = vpack.c.b16 %v234, %v232
        %v241 = vpack.c.b16 %v235, %v233
        %v242 = vpack.c.b16 %v236, %v236
        %v243 = vpack.c.b16 %v237, %v237
        %vm248 = vcmask 326656
        %v250 = vsel %vm248, %v217, 0
        %vm252 = vcmask 1043456
        %v254 = vsel %vm252, %v242, 0
        %v257 = vsel %vm252, %v243, 0
        %259 = vmatprep.subr.bf16.mxu0 %v239
        %260 = vmatpush1.bf16.msra.mxu0 %v238
        %261 = vmatprep.subr.bf16.mxu0 %v241
        %262 = vmatpush1.bf16.msra.mxu0 %v240
        %263 = vmatprep.subr.bf16.mxu0 %v257
        %264 = vmatpush1.bf16.msra.mxu0 %v254
        %265 = vmatprep.subr.bf16.mxu0 0
        %266 = vmatpush1.bf16.msra.mxu0 0
        %267 = vmatprep.subr.bf16.mxu0 0
        %268 = vmatpush1.bf16.msra.mxu0 0
        %269 = vmatprep.subr.bf16.mxu0 0
        %270 = vmatpush1.bf16.msra.mxu0 0
        %271 = vmatprep.subr.bf16.mxu0 0
        %272 = vmatpush1.bf16.msra.mxu0 0
        %273 = vmatprep.subr.bf16.mxu0 0
        %274 = vmatpush1.bf16.msra.mxu0 0
        %275 = vmatprep.subr.bf16.mxu0 0
        %276 = vmatpush1.bf16.msra.mxu0 0
        %277 = vmatprep.subr.bf16.mxu0 0
        %278 = vmatpush1.bf16.msra.mxu0 0
        %279 = vmatprep.subr.bf16.mxu0 0
        %280 = vmatpush1.bf16.msra.mxu0 0
        %281 = vmatprep.subr.bf16.mxu0 0
        %282 = vmatpush1.bf16.msra.mxu0 0
        %283 = vmatprep.subr.bf16.mxu0 0
        %284 = vmatpush1.bf16.msra.mxu0 0
        %285 = vmatprep.subr.bf16.mxu0 0
        %286 = vmatpush1.bf16.msra.mxu0 0
        %287 = vmatprep.subr.bf16.mxu0 0
        %288 = vmatpush1.bf16.msra.mxu0 0
        %289 = vmatprep.subr.bf16.mxu0 0
        %290 = vmatpush1.bf16.msra.mxu0 0
        %291 = vmatprep.mubr.bf16.mxu0 0
        %292 = vmatmul.mubr.bf16.gmra.mrb[0].mxu0 %v250
        %v293 = vpop.f32.mrb[0].mxu0
        %v294 = vadd.f32 0.0, %v293
        %v295 = vpop.f32.mrb[0].mxu0
        %v296 = vadd.f32 0.0, %v295
        %v297 = vpop.f32.mrb[0].mxu0
        %v298 = vpop.f32.mrb[0].mxu0
        %299 = vdwg.mxu0
        %v300 = vpack.c.bf16 %v294, %v294
        %v301 = vpack.c.bf16 %v296, %v296
        %v304 = vunpack.c.l.b16 %v300
        %v305 = vunpack.c.l.b16 %v301
        %v306 = vpack.c.b16 %v305, %v304
        %308 = vst [vmem:[#allocation2] sm:$0xff] %v306
        %v309 = vld [vmem:[#allocation2] sm:$0xff]
        %v310 = vld [vmem:[#allocation8] sm:$0xff]
        %v311 = vld [vmem:[#allocation8 + $0x8] sm:$0xff]
        %v312 = vld [vmem:[#allocation8 + $0x10] sm:$0xff]
        %v313 = vld [vmem:[#allocation8 + $0x18] sm:$0xff]
        %v314 = vld [vmem:[#allocation8 + $0x20] sm:$0xff]
        %v315 = vld [vmem:[#allocation8 + $0x28] sm:$0xff]
        %v316 = vld [vmem:[#allocation8 + $0x30] sm:$0xff]
        %v317 = vld [vmem:[#allocation8 + $0x38] sm:$0xff]
        %v318 = vld [vmem:[#allocation8 + $0x40] sm:$0xff]
        %v319 = vld [vmem:[#allocation8 + $0x48] sm:$0xff]
        %v320 = vld [vmem:[#allocation8 + $0x50] sm:$0xff]
        %v321 = vld [vmem:[#allocation8 + $0x58] sm:$0xff]
        %v322 = vld [vmem:[#allocation8 + $0x60] sm:$0xff]
        %v323 = vld [vmem:[#allocation8 + $0x68] sm:$0xff]
        %v324 = vld [vmem:[#allocation8 + $0x70] sm:$0xff]
        %v325 = vld [vmem:[#allocation8 + $0x78] sm:$0xff]
        %v326 = vld [vmem:[#allocation8 + $0x80] sm:$0xff]
        %v327 = vld [vmem:[#allocation8 + $0x88] sm:$0xff]
        %v328 = vld [vmem:[#allocation8 + $0x90] sm:$0xff]
        %v329 = vld [vmem:[#allocation8 + $0x98] sm:$0xff]
        %v330 = vld [vmem:[#allocation8 + $0xa0] sm:$0xff]
        %v331 = vld [vmem:[#allocation8 + $0xa8] sm:$0xff]
        %v332 = vld [vmem:[#allocation8 + $0xb0] sm:$0xff]
        %v333 = vld [vmem:[#allocation8 + $0xb8] sm:$0xff]
        %v334 = vld [vmem:[#allocation8 + $0xc0] sm:$0xff]
        %v335 = vld [vmem:[#allocation8 + $0xc8] sm:$0xff]
        %v336 = vld [vmem:[#allocation8 + $0xd0] sm:$0xff]
        %v337 = vld [vmem:[#allocation8 + $0xd8] sm:$0xff]
        %v338 = vld [vmem:[#allocation8 + $0xe0] sm:$0xff]
        %v339 = vld [vmem:[#allocation8 + $0xe8] sm:$0xff]
        %v340 = vld [vmem:[#allocation8 + $0xf0] sm:$0xff]
        %v341 = vld [vmem:[#allocation8 + $0xf8] sm:$0xff]
        %v343 = vunpack.c.l.b16 %v309
        %v344 = vunpack.c.h.b16 %v309
        %v345 = vpack.c.b16 %v343, %v343
        %v346 = vpack.c.b16 %v344, %v344
        %v381 = vunpack.c.l.b16 %v310
        %v382 = vunpack.c.h.b16 %v310
        %v383 = vunpack.c.l.b16 %v311
        %v384 = vunpack.c.h.b16 %v311
        %v385 = vunpack.c.l.b16 %v312
        %v386 = vunpack.c.h.b16 %v312
        %v387 = vunpack.c.l.b16 %v313
        %v388 = vunpack.c.h.b16 %v313
        %v389 = vunpack.c.l.b16 %v314
        %v390 = vunpack.c.h.b16 %v314
        %v391 = vunpack.c.l.b16 %v315
        %v392 = vunpack.c.h.b16 %v315
        %v393 = vunpack.c.l.b16 %v316
        %v394 = vunpack.c.h.b16 %v316
        %v395 = vunpack.c.l.b16 %v317
        %v396 = vunpack.c.h.b16 %v317
        %v397 = vunpack.c.l.b16 %v318
        %v398 = vunpack.c.h.b16 %v318
        %v399 = vunpack.c.l.b16 %v319
        %v400 = vunpack.c.h.b16 %v319
        %v401 = vunpack.c.l.b16 %v320
        %v402 = vunpack.c.h.b16 %v320
        %v403 = vunpack.c.l.b16 %v321
        %v404 = vunpack.c.h.b16 %v321
        %v405 = vunpack.c.l.b16 %v322
        %v406 = vunpack.c.h.b16 %v322
        %v407 = vunpack.c.l.b16 %v323
        %v408 = vunpack.c.h.b16 %v323
        %v409 = vunpack.c.l.b16 %v324
        %v410 = vunpack.c.h.b16 %v324
        %v411 = vunpack.c.l.b16 %v325
        %v412 = vunpack.c.h.b16 %v325
        %v413 = vunpack.c.l.b16 %v326
        %v414 = vunpack.c.h.b16 %v326
        %v415 = vunpack.c.l.b16 %v327
        %v416 = vunpack.c.h.b16 %v327
        %v417 = vunpack.c.l.b16 %v328
        %v418 = vunpack.c.h.b16 %v328
        %v419 = vunpack.c.l.b16 %v329
        %v420 = vunpack.c.h.b16 %v329
        %v421 = vunpack.c.l.b16 %v330
        %v422 = vunpack.c.h.b16 %v330
        %v423 = vunpack.c.l.b16 %v331
        %v424 = vunpack.c.h.b16 %v331
        %v425 = vunpack.c.l.b16 %v332
        %v426 = vunpack.c.h.b16 %v332
        %v427 = vunpack.c.l.b16 %v333
        %v428 = vunpack.c.h.b16 %v333
        %v429 = vunpack.c.l.b16 %v334
        %v430 = vunpack.c.h.b16 %v334
        %v431 = vunpack.c.l.b16 %v335
        %v432 = vunpack.c.h.b16 %v335
        %v433 = vunpack.c.l.b16 %v336
        %v434 = vunpack.c.h.b16 %v336
        %v435 = vunpack.c.l.b16 %v337
        %v436 = vunpack.c.h.b16 %v337
        %v437 = vunpack.c.l.b16 %v338
        %v438 = vunpack.c.h.b16 %v338
        %v439 = vunpack.c.l.b16 %v339
        %v440 = vunpack.c.h.b16 %v339
        %v441 = vunpack.c.l.b16 %v340
        %v442 = vunpack.c.h.b16 %v340
        %v443 = vunpack.c.l.b16 %v341
        %v444 = vunpack.c.h.b16 %v341
        %v445 = vpack.c.b16 %v383, %v381
        %v446 = vpack.c.b16 %v384, %v382
        %v447 = vpack.c.b16 %v387, %v385
        %v448 = vpack.c.b16 %v388, %v386
        %v449 = vpack.c.b16 %v391, %v389
        %v450 = vpack.c.b16 %v392, %v390
        %v451 = vpack.c.b16 %v395, %v393
        %v452 = vpack.c.b16 %v396, %v394
        %v453 = vpack.c.b16 %v399, %v397
        %v454 = vpack.c.b16 %v400, %v398
        %v455 = vpack.c.b16 %v403, %v401
        %v456 = vpack.c.b16 %v404, %v402
        %v457 = vpack.c.b16 %v407, %v405
        %v458 = vpack.c.b16 %v408, %v406
        %v459 = vpack.c.b16 %v411, %v409
        %v460 = vpack.c.b16 %v412, %v410
        %v461 = vpack.c.b16 %v415, %v413
        %v462 = vpack.c.b16 %v416, %v414
        %v463 = vpack.c.b16 %v419, %v417
        %v464 = vpack.c.b16 %v420, %v418
        %v465 = vpack.c.b16 %v423, %v421
        %v466 = vpack.c.b16 %v424, %v422
        %v467 = vpack.c.b16 %v427, %v425
        %v468 = vpack.c.b16 %v428, %v426
        %v469 = vpack.c.b16 %v431, %v429
        %v470 = vpack.c.b16 %v432, %v430
        %v471 = vpack.c.b16 %v435, %v433
        %v472 = vpack.c.b16 %v436, %v434
        %v473 = vpack.c.b16 %v439, %v437
        %v474 = vpack.c.b16 %v440, %v438
        %v475 = vpack.c.b16 %v443, %v441
        %v476 = vpack.c.b16 %v444, %v442
        %509 = vmatprep.subr.bf16.mxu0 %v446
        %510 = vmatpush1.bf16.msra.mxu0 %v445
        %511 = vmatprep.subr.bf16.mxu0 %v448
        %512 = vmatpush1.bf16.msra.mxu0 %v447
        %513 = vmatprep.subr.bf16.mxu0 %v450
        %514 = vmatpush1.bf16.msra.mxu0 %v449
        %515 = vmatprep.subr.bf16.mxu0 %v452
        %516 = vmatpush1.bf16.msra.mxu0 %v451
        %517 = vmatprep.subr.bf16.mxu0 %v454
        %518 = vmatpush1.bf16.msra.mxu0 %v453
        %519 = vmatprep.subr.bf16.mxu0 %v456
        %520 = vmatpush1.bf16.msra.mxu0 %v455
        %521 = vmatprep.subr.bf16.mxu0 %v458
        %522 = vmatpush1.bf16.msra.mxu0 %v457
        %523 = vmatprep.subr.bf16.mxu0 %v460
        %524 = vmatpush1.bf16.msra.mxu0 %v459
        %525 = vmatprep.subr.bf16.mxu0 %v462
        %526 = vmatpush1.bf16.msra.mxu0 %v461
        %527 = vmatprep.subr.bf16.mxu0 %v464
        %528 = vmatpush1.bf16.msra.mxu0 %v463
        %529 = vmatprep.subr.bf16.mxu0 %v466
        %530 = vmatpush1.bf16.msra.mxu0 %v465
        %531 = vmatprep.subr.bf16.mxu0 %v468
        %532 = vmatpush1.bf16.msra.mxu0 %v467
        %533 = vmatprep.subr.bf16.mxu0 %v470
        %534 = vmatpush1.bf16.msra.mxu0 %v469
        %535 = vmatprep.subr.bf16.mxu0 %v472
        %536 = vmatpush1.bf16.msra.mxu0 %v471
        %537 = vmatprep.subr.bf16.mxu0 %v474
        %538 = vmatpush1.bf16.msra.mxu0 %v473
        %539 = vmatprep.subr.bf16.mxu0 %v476
        %540 = vmatpush1.bf16.msra.mxu0 %v475
        %541 = vmatprep.mubr.bf16.mxu0 %v346
        %542 = vmatmul.mubr.bf16.gmra.mrb[0].mxu0 %v345
        %v543 = vpop.f32.mrb[0].mxu0
        %v544 = vadd.f32 0.0, %v543
        %v545 = vpop.f32.mrb[0].mxu0
        %v546 = vadd.f32 0.0, %v545
        %v547 = vpop.f32.mrb[0].mxu0
        %v548 = vpop.f32.mrb[0].mxu0
        %549 = vdwg.mxu0
        %550 = vst [vmem:[%s215] sm:$0xff] %v544
        %551 = vst [vmem:[%s215 + $0x8] sm:$0xff] %v546
        %s552 = sand.u32 %s97, 1
        %s553 = scalar_lea.sflag [#allocation5], %s552
        %s554 = sand.u32 %s97, 1
        %s555 = smul.addr %s554, 16
        %s556 = scalar_lea.vmem [#allocation9], %s555
        // Predicated region
        $region45: #{tpu_custom_call.1} parent=31 // pred_check
          %p557 = pneg %p107
        $region46: #{tpu_custom_call.1} parent=31 // pred_check_branch
          %559 = sbr.rel (%p557) target = $region48
        $region47: #{tpu_custom_call.1} parent=31 // pred_region
          %s561 = ssub.s32 256, 256
          %562 = vsyncadd %s553, %s561
          %s563 = smul.addr %s21, 2
          %s564 = smul.addr %s563, 128
          %s565 = scalar_lea.hbm %s3, %s564
          %s567 = sshll.u32 %s556, 4
          %s568 = int_to_ptr.vmem [resolvable:$true] %s567
          %570 = dma.vmem_to_hbm [thread:$0]  %s568, 256, %s565, %s553
        $region48: #{tpu_custom_call.1} parent=31 // pred_fallthru
          _
      $region32: #{tpu_custom_call.1} parent=5 // pred_fallthru
        _
      %p571 = scmp.le.s32.totalorder 2, %s16
      // Predicated region
      $region49: #{tpu_custom_call.1} parent=5 // pred_check
        %p572 = pneg %p571
      $region50: #{tpu_custom_call.1} parent=5 // pred_check_branch
        %574 = sbr.rel (%p572) target = $region52
      $region51: #{tpu_custom_call.1} parent=5 // pred_region
        %s575 = ssub.s32 %s16, 2
        // Predicated region
        $region53: #{tpu_custom_call.1} parent=51 // pred_check
          %p576 = pneg %p113
        $region54: #{tpu_custom_call.1} parent=51 // pred_check_branch
          %578 = sbr.rel (%p576) target = $region56
        $region55: #{tpu_custom_call.1} parent=51 // pred_region
          %s579 = sand.u32 %s98, 1
          %s580 = scalar_lea.sflag [#allocation5], %s579
          %s581 = sand.u32 %s98, 1
          %s582 = smul.addr %s581, 16
          %s583 = scalar_lea.vmem [#allocation9], %s582
          %584 = dma.done %s580, 256
        $region56: #{tpu_custom_call.1} parent=51 // pred_fallthru
          _
      $region52: #{tpu_custom_call.1} parent=5 // pred_fallthru
        _
    $region6: #{tpu_custom_call.1} parent=1 // loop_footer
      %s20 = sadd.s32 1, %s16
    $region7: #{tpu_custom_call.1} parent=1 // loop_footer_branch
      %15 = sbr.rel target = $region3
    $region8: #{tpu_custom_call.1} parent=1 // loop_exit
      _
    %585 = vsyncpa [#allocation4], 1
    %s586 = scalar_lea.sflag [#allocation4], 1
    %587 = vsyncpa %s586, 1
    %588 = vsyncpa [#allocation7], 1
    %589 = vsyncpa [#allocation5], 1
    %s590 = scalar_lea.sflag [#allocation5], 1
    %591 = vsyncpa %s590, 1

</llo_original>
